<compile_context>
chip_gen: v6e
topology: v6e:2x2x1
jax: 0.10.0
libtpu: 0.0.40
codegen_flags: <defaults>
</compile_context>

<pallas_src>
import jax
import jax.numpy as jnp
from jax import lax
from jax.experimental import pallas as pl
from jax.experimental.pallas import tpu as pltpu

HIDDEN = 64


def mlp_kernel(x_ref, w1_ref, b1_ref, w2_ref, b2_ref, w3_ref, b3_ref, o_ref):
    # One batch tile (TB rows) per grid step; everything stays on-chip.
    x = x_ref[...]                                                        # (TB, D)
    h1 = jnp.dot(x, w1_ref[...], preferred_element_type=jnp.float32) + b1_ref[...]
    h1 = jnp.maximum(h1, 0.0)                                             # relu(fc1)
    h2 = jnp.dot(h1, w2_ref[...], preferred_element_type=jnp.float32) + b2_ref[...]
    h2 = jnp.maximum(h2, 0.0)                                             # relu(fc2)
    # fc3 (64 -> 1) computed transposed: contract the 64-wide feature axis of
    # w3 (1, 64) against the feature axis of h2 (TB, 64) -> (1, TB).
    # The stored tile is lane-dense (last dim = TB, multiple of 128) instead of
    # a 1-lane masked-store column, and the MXU sees N = TB rather than N = 1.
    o_t = lax.dot_general(
        w3_ref[...], h2,
        dimension_numbers=(((1,), (1,)), ((), ())),
        preferred_element_type=jnp.float32,
    )                                                                     # (1, TB)
    o_ref[...] = o_t + b3_ref[...]                                        # broadcast (1,1)


def simple_nn_forward(x, params, *, tile_b=256):
    """x: (B, input_dim) f32. params: w1 (D,64), b1 (1,64), w2 (64,64), b2 (1,64),
    w3 (1,64) (PyTorch fc3.weight layout), b3 (1,1). Returns (B, 1) f32."""
    B, D = x.shape
    w1, b1, w2, b2, w3, b3 = (params[k] for k in ("w1", "b1", "w2", "b2", "w3", "b3"))

    # tile_b must be a multiple of 128 so the (1, tile_b) output tile is lane-dense.
    assert tile_b % 128 == 0
    n_tiles = pl.cdiv(B, tile_b)
    b_pad = n_tiles * tile_b
    if b_pad != B:
        x = jnp.pad(x, ((0, b_pad - B), (0, 0)))

    # Constant index_map => block stays VMEM-resident across grid steps (no re-DMA).
    const = lambda a: pl.BlockSpec(a.shape, lambda i: (0,) * a.ndim)

    out_t = pl.pallas_call(
        mlp_kernel,
        out_shape=jax.ShapeDtypeStruct((1, b_pad), jnp.float32),
        grid_spec=pltpu.PrefetchScalarGridSpec(
            num_scalar_prefetch=0,
            grid=(n_tiles,),
            in_specs=[
                pl.BlockSpec((tile_b, D), lambda i: (i, 0)),  # x: streamed per batch tile
                const(w1), const(b1),                         # fc1 (resident)
                const(w2), const(b2),                         # fc2 (resident)
                const(w3), const(b3),                         # fc3 (resident)
            ],
            out_specs=pl.BlockSpec((1, tile_b), lambda i: (0, i)),
        ),
        compiler_params=pltpu.CompilerParams(
            dimension_semantics=("parallel",),  # shard batch tiles across TCs on v7x
            vmem_limit_bytes=32 << 20,
        ),
    )(x, w1, b1, w2, b2, w3, b3)

    # (1, b_pad) row-major is the same memory order as (b_pad, 1): free reshape,
    # then drop any padding rows.
    return out_t.reshape(b_pad, 1)[:B]


def init_params(key, input_dim, hidden=HIDDEN):
    """Deterministic PyTorch-style init: U(-1/sqrt(fan_in), 1/sqrt(fan_in))."""
    def linear(k, fan_in, fan_out, transposed=False):
        kw, kb = jax.random.split(k)
        bound = 1.0 / jnp.sqrt(fan_in)
        shape = (fan_out, fan_in) if transposed else (fan_in, fan_out)
        w = jax.random.uniform(kw, shape, jnp.float32, -bound, bound)
        b = jax.random.uniform(kb, (1, fan_out), jnp.float32, -bound, bound)
        return w, b

    k1, k2, k3 = jax.random.split(key, 3)
    w1, b1 = linear(k1, input_dim, hidden)
    w2, b2 = linear(k2, hidden, hidden)
    w3, b3 = linear(k3, hidden, 1, transposed=True)   # w3: (1, hidden), b3: (1, 1)
    return {"w1": w1, "b1": b1, "w2": w2, "b2": b2, "w3": w3, "b3": b3}


def reference_forward(x, p):
    h1 = jnp.maximum(x @ p["w1"] + p["b1"], 0.0)
    h2 = jnp.maximum(h1 @ p["w2"] + p["b2"], 0.0)
    return h2 @ p["w3"].T + p["b3"]


if __name__ == "__main__":
    key = jax.random.PRNGKey(0)
    kx, kp = jax.random.split(key)

    input_dim = 32
    params = init_params(kp, input_dim)

    # Main check: batch large enough to exercise the batch grid (2 tiles of 256).
    batch = 512
    x = jax.random.normal(kx, (batch, input_dim), dtype=jnp.float32)
    out = jax.block_until_ready(simple_nn_forward(x, params))
    ref = reference_forward(x, params)
    assert out.shape == (batch, 1), out.shape
    assert jnp.allclose(out, ref, atol=2e-5, rtol=2e-5), "mismatch vs reference (B=512)"

    # Small-batch path (pads up to one tile, result sliced back).
    x_small = x[:8]
    out_small = jax.block_until_ready(simple_nn_forward(x_small, params))
    ref_small = reference_forward(x_small, params)
    assert out_small.shape == (8, 1), out_small.shape
    assert jnp.allclose(out_small, ref_small, atol=2e-5, rtol=2e-5), "mismatch vs reference (B=8)"

    print("KERNEL_OK")
</pallas_src>

<mosaic_0001>
module attributes {stable_mosaic.version = 11 : i64} {
  func.func @mlp_kernel(%arg0: i32, %arg1: memref<256x32xf32, #tpu.memory_space<vmem>>, %arg2: memref<32x64xf32, #tpu.memory_space<vmem>>, %arg3: memref<1x64xf32, #tpu.memory_space<vmem>>, %arg4: memref<64x64xf32, #tpu.memory_space<vmem>>, %arg5: memref<1x64xf32, #tpu.memory_space<vmem>>, %arg6: memref<1x64xf32, #tpu.memory_space<vmem>>, %arg7: memref<1x1xf32, #tpu.memory_space<vmem>>, %arg8: memref<1x256xf32, #tpu.memory_space<vmem>>) attributes {dimension_semantics = [#tpu.dimension_semantics<parallel>], iteration_bounds = array<i64: 2>, scalar_prefetch = 0 : i64, scratch_operands = 0 : i64, tpu.core_type = #tpu.core_type<tc>, window_params = [{transform_indices = @transform_0, window_bounds = array<i64: 256, 32>}, {pipeline_mode = #tpu.pipeline_mode<synchronous>, transform_indices = @transform_1, window_bounds = array<i64: 32, 64>}, {pipeline_mode = #tpu.pipeline_mode<synchronous>, transform_indices = @transform_2, window_bounds = array<i64: 1, 64>}, {pipeline_mode = #tpu.pipeline_mode<synchronous>, transform_indices = @transform_3, window_bounds = array<i64: 64, 64>}, {pipeline_mode = #tpu.pipeline_mode<synchronous>, transform_indices = @transform_4, window_bounds = array<i64: 1, 64>}, {pipeline_mode = #tpu.pipeline_mode<synchronous>, transform_indices = @transform_5, window_bounds = array<i64: 1, 64>}, {pipeline_mode = #tpu.pipeline_mode<synchronous>, transform_indices = @transform_6, window_bounds = array<i64: 1, 1>}, {transform_indices = @transform_7, window_bounds = array<i64: 1, 256>}]} {
    %c0 = arith.constant 0 : index
    %c0_0 = arith.constant 0 : index
    %0 = vector.load %arg1[%c0, %c0_0] : memref<256x32xf32, #tpu.memory_space<vmem>>, vector<256x32xf32>
    %c0_1 = arith.constant 0 : index
    %c0_2 = arith.constant 0 : index
    %1 = vector.load %arg2[%c0_1, %c0_2] : memref<32x64xf32, #tpu.memory_space<vmem>>, vector<32x64xf32>
    %cst = arith.constant dense<0.000000e+00> : vector<256x64xf32>
    %2 = tpu.matmul %0, %1, %cst {dimension_numbers = #tpu.dot_dimension_numbers<[1], [0], [0], [1], [0, 0, 1, 1], [], []>} : vector<256x32xf32>, vector<32x64xf32>, vector<256x64xf32> -> vector<256x64xf32>
    %c0_3 = arith.constant 0 : index
    %c0_4 = arith.constant 0 : index
    %3 = vector.load %arg3[%c0_3, %c0_4] : memref<1x64xf32, #tpu.memory_space<vmem>>, vector<1x64xf32>
    %4 = vector.broadcast %3 : vector<1x64xf32> to vector<256x64xf32>
    %5 = arith.addf %2, %4 : vector<256x64xf32>
    %cst_5 = arith.constant 0.000000e+00 : f32
    %6 = vector.broadcast %cst_5 : f32 to vector<256x64xf32>
    %7 = arith.maximumf %5, %6 : vector<256x64xf32>
    %c0_6 = arith.constant 0 : index
    %c0_7 = arith.constant 0 : index
    %8 = vector.load %arg4[%c0_6, %c0_7] : memref<64x64xf32, #tpu.memory_space<vmem>>, vector<64x64xf32>
    %cst_8 = arith.constant dense<0.000000e+00> : vector<256x64xf32>
    %9 = tpu.matmul %7, %8, %cst_8 {dimension_numbers = #tpu.dot_dimension_numbers<[1], [0], [0], [1], [0, 0, 1, 1], [], []>} : vector<256x64xf32>, vector<64x64xf32>, vector<256x64xf32> -> vector<256x64xf32>
    %c0_9 = arith.constant 0 : index
    %c0_10 = arith.constant 0 : index
    %10 = vector.load %arg5[%c0_9, %c0_10] : memref<1x64xf32, #tpu.memory_space<vmem>>, vector<1x64xf32>
    %11 = vector.broadcast %10 : vector<1x64xf32> to vector<256x64xf32>
    %12 = arith.addf %9, %11 : vector<256x64xf32>
    %cst_11 = arith.constant 0.000000e+00 : f32
    %13 = vector.broadcast %cst_11 : f32 to vector<256x64xf32>
    %14 = arith.maximumf %12, %13 : vector<256x64xf32>
    %c0_12 = arith.constant 0 : index
    %c0_13 = arith.constant 0 : index
    %15 = vector.load %arg6[%c0_12, %c0_13] : memref<1x64xf32, #tpu.memory_space<vmem>>, vector<1x64xf32>
    %cst_14 = arith.constant dense<0.000000e+00> : vector<1x256xf32>
    %16 = tpu.matmul %15, %14, %cst_14 {dimension_numbers = #tpu.dot_dimension_numbers<[1], [1], [0], [0], [0, 0, 1, 0], [], []>} : vector<1x64xf32>, vector<256x64xf32>, vector<1x256xf32> -> vector<1x256xf32>
    %c0_15 = arith.constant 0 : index
    %c0_16 = arith.constant 0 : index
    %17 = vector.load %arg7[%c0_15, %c0_16] : memref<1x1xf32, #tpu.memory_space<vmem>>, vector<1x1xf32>
    %18 = vector.broadcast %17 : vector<1x1xf32> to vector<1x256xf32>
    %19 = arith.addf %16, %18 : vector<1x256xf32>
    %c0_17 = arith.constant 0 : index
    %c0_18 = arith.constant 0 : index
    %20 = vector.load %arg8[%c0_17, %c0_18] : memref<1x256xf32, #tpu.memory_space<vmem>>, vector<1x256xf32>
    tpu.vector_store %arg8[%c0_17, %c0_18], %19 {strides = array<i32>} : memref<1x256xf32, #tpu.memory_space<vmem>>, vector<1x256xf32>,
    return
  }
  func.func @transform_0(%arg0: i32) -> (i32, i32) {
    %c0_i32 = arith.constant 0 : i32
    %c0_i32_0 = arith.constant 0 : i32
    return %arg0, %c0_i32 : i32, i32
  }
  func.func @transform_1(%arg0: i32) -> (i32, i32) {
    %c0_i32 = arith.constant 0 : i32
    %c0_i32_0 = arith.constant 0 : i32
    %c0_i32_1 = arith.constant 0 : i32
    return %c0_i32, %c0_i32_0 : i32, i32
  }
  func.func @transform_2(%arg0: i32) -> (i32, i32) {
    %c0_i32 = arith.constant 0 : i32
    %c0_i32_0 = arith.constant 0 : i32
    %c0_i32_1 = arith.constant 0 : i32
    return %c0_i32, %c0_i32_0 : i32, i32
  }
  func.func @transform_3(%arg0: i32) -> (i32, i32) {
    %c0_i32 = arith.constant 0 : i32
    %c0_i32_0 = arith.constant 0 : i32
    %c0_i32_1 = arith.constant 0 : i32
    return %c0_i32, %c0_i32_0 : i32, i32
  }
  func.func @transform_4(%arg0: i32) -> (i32, i32) {
    %c0_i32 = arith.constant 0 : i32
    %c0_i32_0 = arith.constant 0 : i32
    %c0_i32_1 = arith.constant 0 : i32
    return %c0_i32, %c0_i32_0 : i32, i32
  }
  func.func @transform_5(%arg0: i32) -> (i32, i32) {
    %c0_i32 = arith.constant 0 : i32
    %c0_i32_0 = arith.constant 0 : i32
    %c0_i32_1 = arith.constant 0 : i32
    return %c0_i32, %c0_i32_0 : i32, i32
  }
  func.func @transform_6(%arg0: i32) -> (i32, i32) {
    %c0_i32 = arith.constant 0 : i32
    %c0_i32_0 = arith.constant 0 : i32
    %c0_i32_1 = arith.constant 0 : i32
    return %c0_i32, %c0_i32_0 : i32, i32
  }
  func.func @transform_7(%arg0: i32) -> (i32, i32) {
    %c0_i32 = arith.constant 0 : i32
    %c0_i32_0 = arith.constant 0 : i32
    return %c0_i32, %arg0 : i32, i32
  }
}

</mosaic_0001>

<llo_original>
// kernel: tpu_custom_call.1
$region0: #{tpu_custom_call.1}
  #allocation0 [shape = 'u32[]', space=smem, size = 0x4, offset = 0x4, fixed_abs, tag = 'smem constant byte address 0x4 - core index']
  #allocation1 [shape = 'u32[144,128]{1,0:T(1,128)}', space=vmem, size = 0x12000, scoped, tag = 'internal scratch']
  #allocation2 [shape = 'f32[1,1]{1,0:T(1,128)S(1)}', space=vmem, size = 0x200, scoped, tag = 'scoped memory for tpu_custom_call.1']
  %s0 = inlined_call_operand.vmem [shape: f32[512,32], index: 0, kind: input, shape index: {}]
  %s1 = inlined_call_operand.vmem [shape: f32[32,64], index: 1, kind: input, shape index: {}]
  %s2 = inlined_call_operand.vmem [shape: f32[1,64], index: 2, kind: input, shape index: {}]
  %s3 = inlined_call_operand.vmem [shape: f32[64,64], index: 3, kind: input, shape index: {}]
  %s4 = inlined_call_operand.vmem [shape: f32[1,64], index: 4, kind: input, shape index: {}]
  %s5 = inlined_call_operand.vmem [shape: f32[1,64], index: 5, kind: input, shape index: {}]
  %s6 = inlined_call_operand.<no memory space> [shape: f32[1,1], index: 6, kind: input, shape index: {}]
  %s7 = inlined_call_operand.hbm [shape: f32[1,512], index: 7, kind: output, shape index: {}]
  %s8 = sld [smem:[#allocation0]]
  $region61: #{tpu_custom_call.1} parent=0
    _
  %s10 = ssub.s32 1, %s8
  %s11 = scalar_select 0, %s10, %s8
  %v12 = vstv %s6
  %13 = vst [vmem:[#allocation2] sm:$0x1] %v12
  $region1: #{tpu_custom_call.1} parent=0
    #allocation3 [shape = 'u8[2048]{0}', space=vmem, size = 0x800, scoped, tag = 'output window, operand 0']
    #allocation4 [shape = 's32[2]{0}', space=sflag, size = 0x8, scoped, tag = 'scoped memory for tpu_custom_call.1']
    %14 = vsyncpa [#allocation4], 0
    %s15 = scalar_lea.sflag [#allocation4], 1
    %16 = vsyncpa %s15, 0
    loop: start=0, step=1, limit=4
    $region2: #{tpu_custom_call.1} parent=1 // loop_pre_header
      _
    $region3: #{tpu_custom_call.1} parent=1 // loop_header
      %s18 = sphi 0, %s22
      %p19 = scmp.ge.s32.totalorder %s18, 4
      %s28 = sphi 0, %s30
      %s31 = sphi 0, %s28
      %s32 = sphi 0, %s31
      %s48 = sphi 0, %s32
      %s52 = sphi 0, %s52
      %s54 = sphi 0, %s52
      %s55 = sphi 0, %s54
      %s69 = sphi 0, %s55
      %s73 = sphi 0, %s73
      %s75 = sphi 0, %s73
      %s76 = sphi 0, %s75
      %s90 = sphi 0, %s76
      %s94 = sphi 0, %s94
      %s96 = sphi 0, %s94
      %s97 = sphi 0, %s96
      %s111 = sphi 0, %s97
      %s115 = sphi 0, %s115
      %s117 = sphi 0, %s115
      %s118 = sphi 0, %s117
      %s132 = sphi 0, %s118
      %s136 = sphi 0, %s136
      %s138 = sphi 0, %s136
      %s139 = sphi 0, %s138
      %s153 = sphi 0, %s139
      %s157 = sphi 0, %s157
      %s159 = sphi 0, %s157
      %s160 = sphi 0, %s159
      %s174 = sphi 0, %s160
      %s180 = sphi 0, %s182
      %s183 = sphi 0, %s180
      %s184 = sphi 0, %s183
      %s200 = sphi 0, %s184
    $region4: #{tpu_custom_call.1} parent=1 // loop_header_branch
      %21 = sbr.rel (%p19) target = $region8
    $region5: #{tpu_custom_call.1} parent=1 // loop_body
      %s23 = ssub.s32 %s18, 1
      %s24 = ssub.s32 %s18, 2
      %s25 = sadd.s32 %s18, 1
      %s26 = ssub.s32 %s18, %s25
      %p27 = scmp.eq.s32.totalorder %s26, 0
      %s29 = sadd.s32 %s28, 1
      %s30 = scalar_select %p27, %s28, %s29
      %p33 = pneg %p27
      %p34 = scmp.eq.s32.totalorder %s18, 1
      %p35 = por %p33, %p34
      %p36 = scmp.ne.s32.totalorder %s28, %s31
      %p37 = scmp.eq.s32.totalorder %s18, 0
      %p38 = por %p36, %p37
      %p39 = scmp.ne.s32.totalorder %s28, %s31
      %p40 = scmp.eq.s32.totalorder %s23, 1
      %p41 = por %p39, %p40
      %p42 = scmp.ne.s32.totalorder %s31, %s32
      %p43 = scmp.eq.s32.totalorder %s23, 0
      %p44 = por %p42, %p43
      %p45 = scmp.ne.s32.totalorder %s31, %s32
      %p46 = scmp.eq.s32.totalorder %s24, 1
      %p47 = por %p45, %p46
      %p49 = scmp.ne.s32.totalorder %s32, %s48
      %p50 = scmp.eq.s32.totalorder %s24, 0
      %p51 = por %p49, %p50
      %s53 = sadd.s32 %s52, 1
      %p56 = scmp.eq.s32.totalorder %s18, 1
      %p57 = scmp.ne.s32.totalorder %s52, %s54
      %p58 = scmp.eq.s32.totalorder %s18, 0
      %p59 = por %p57, %p58
      %p60 = scmp.ne.s32.totalorder %s52, %s54
      %p61 = scmp.eq.s32.totalorder %s23, 1
      %p62 = por %p60, %p61
      %p63 = scmp.ne.s32.totalorder %s54, %s55
      %p64 = scmp.eq.s32.totalorder %s23, 0
      %p65 = por %p63, %p64
      %p66 = scmp.ne.s32.totalorder %s54, %s55
      %p67 = scmp.eq.s32.totalorder %s24, 1
      %p68 = por %p66, %p67
      %p70 = scmp.ne.s32.totalorder %s55, %s69
      %p71 = scmp.eq.s32.totalorder %s24, 0
      %p72 = por %p70, %p71
      %s74 = sadd.s32 %s73, 1
      %p77 = scmp.eq.s32.totalorder %s18, 1
      %p78 = scmp.ne.s32.totalorder %s73, %s75
      %p79 = scmp.eq.s32.totalorder %s18, 0
      %p80 = por %p78, %p79
      %p81 = scmp.ne.s32.totalorder %s73, %s75
      %p82 = scmp.eq.s32.totalorder %s23, 1
      %p83 = por %p81, %p82
      %p84 = scmp.ne.s32.totalorder %s75, %s76
      %p85 = scmp.eq.s32.totalorder %s23, 0
      %p86 = por %p84, %p85
      %p87 = scmp.ne.s32.totalorder %s75, %s76
      %p88 = scmp.eq.s32.totalorder %s24, 1
      %p89 = por %p87, %p88
      %p91 = scmp.ne.s32.totalorder %s76, %s90
      %p92 = scmp.eq.s32.totalorder %s24, 0
      %p93 = por %p91, %p92
      %s95 = sadd.s32 %s94, 1
      %p98 = scmp.eq.s32.totalorder %s18, 1
      %p99 = scmp.ne.s32.totalorder %s94, %s96
      %p100 = scmp.eq.s32.totalorder %s18, 0
      %p101 = por %p99, %p100
      %p102 = scmp.ne.s32.totalorder %s94, %s96
      %p103 = scmp.eq.s32.totalorder %s23, 1
      %p104 = por %p102, %p103
      %p105 = scmp.ne.s32.totalorder %s96, %s97
      %p106 = scmp.eq.s32.totalorder %s23, 0
      %p107 = por %p105, %p106
      %p108 = scmp.ne.s32.totalorder %s96, %s97
      %p109 = scmp.eq.s32.totalorder %s24, 1
      %p110 = por %p108, %p109
      %p112 = scmp.ne.s32.totalorder %s97, %s111
      %p113 = scmp.eq.s32.totalorder %s24, 0
      %p114 = por %p112, %p113
      %s116 = sadd.s32 %s115, 1
      %p119 = scmp.eq.s32.totalorder %s18, 1
      %p120 = scmp.ne.s32.totalorder %s115, %s117
      %p121 = scmp.eq.s32.totalorder %s18, 0
      %p122 = por %p120, %p121
      %p123 = scmp.ne.s32.totalorder %s115, %s117
      %p124 = scmp.eq.s32.totalorder %s23, 1
      %p125 = por %p123, %p124
      %p126 = scmp.ne.s32.totalorder %s117, %s118
      %p127 = scmp.eq.s32.totalorder %s23, 0
      %p128 = por %p126, %p127
      %p129 = scmp.ne.s32.totalorder %s117, %s118
      %p130 = scmp.eq.s32.totalorder %s24, 1
      %p131 = por %p129, %p130
      %p133 = scmp.ne.s32.totalorder %s118, %s132
      %p134 = scmp.eq.s32.totalorder %s24, 0
      %p135 = por %p133, %p134
      %s137 = sadd.s32 %s136, 1
      %p140 = scmp.eq.s32.totalorder %s18, 1
      %p141 = scmp.ne.s32.totalorder %s136, %s138
      %p142 = scmp.eq.s32.totalorder %s18, 0
      %p143 = por %p141, %p142
      %p144 = scmp.ne.s32.totalorder %s136, %s138
      %p145 = scmp.eq.s32.totalorder %s23, 1
      %p146 = por %p144, %p145
      %p147 = scmp.ne.s32.totalorder %s138, %s139
      %p148 = scmp.eq.s32.totalorder %s23, 0
      %p149 = por %p147, %p148
      %p150 = scmp.ne.s32.totalorder %s138, %s139
      %p151 = scmp.eq.s32.totalorder %s24, 1
      %p152 = por %p150, %p151
      %p154 = scmp.ne.s32.totalorder %s139, %s153
      %p155 = scmp.eq.s32.totalorder %s24, 0
      %p156 = por %p154, %p155
      %s158 = sadd.s32 %s157, 1
      %p161 = scmp.eq.s32.totalorder %s18, 1
      %p162 = scmp.ne.s32.totalorder %s157, %s159
      %p163 = scmp.eq.s32.totalorder %s18, 0
      %p164 = por %p162, %p163
      %p165 = scmp.ne.s32.totalorder %s157, %s159
      %p166 = scmp.eq.s32.totalorder %s23, 1
      %p167 = por %p165, %p166
      %p168 = scmp.ne.s32.totalorder %s159, %s160
      %p169 = scmp.eq.s32.totalorder %s23, 0
      %p170 = por %p168, %p169
      %p171 = scmp.ne.s32.totalorder %s159, %s160
      %p172 = scmp.eq.s32.totalorder %s24, 1
      %p173 = por %p171, %p172
      %p175 = scmp.ne.s32.totalorder %s160, %s174
      %p176 = scmp.eq.s32.totalorder %s24, 0
      %p177 = por %p175, %p176
      %s178 = ssub.s32 %s18, %s25
      %p179 = scmp.eq.s32.totalorder %s178, 0
      %s181 = sadd.s32 %s180, 1
      %s182 = scalar_select %p179, %s180, %s181
      %p185 = pneg %p179
      %p186 = scmp.eq.s32.totalorder %s18, 1
      %p187 = por %p185, %p186
      %p188 = scmp.ne.s32.totalorder %s180, %s183
      %p189 = scmp.eq.s32.totalorder %s18, 0
      %p190 = por %p188, %p189
      %p191 = scmp.ne.s32.totalorder %s180, %s183
      %p192 = scmp.eq.s32.totalorder %s23, 1
      %p193 = por %p191, %p192
      %p194 = scmp.ne.s32.totalorder %s183, %s184
      %p195 = scmp.eq.s32.totalorder %s23, 0
      %p196 = por %p194, %p195
      %p197 = scmp.ne.s32.totalorder %s183, %s184
      %p198 = scmp.eq.s32.totalorder %s24, 1
      %p199 = por %p197, %p198
      %p201 = scmp.ne.s32.totalorder %s184, %s200
      %p202 = scmp.eq.s32.totalorder %s24, 0
      %p203 = por %p201, %p202
      %p204 = scmp.le.s32.totalorder 1, %s18
      %p205 = scmp.lt.s32.totalorder %s18, 3
      %p206 = pnand %p204, %p205
      %p207 = pneg %p206
      // Predicated region
      $region9: #{tpu_custom_call.1} parent=5 // pred_check
        _
      $region10: #{tpu_custom_call.1} parent=5 // pred_check_branch
        %209 = sbr.rel (%p206) target = $region12
      $region11: #{tpu_custom_call.1} parent=5 // pred_region
        %s210 = ssub.s32 %s18, 1
        // Predicated region
        $region13: #{tpu_custom_call.1} parent=11 // pred_check
          %p211 = pneg %p65
        $region14: #{tpu_custom_call.1} parent=11 // pred_check_branch
          %213 = sbr.rel (%p211) target = $region16
        $region15: #{tpu_custom_call.1} parent=11 // pred_region
          _
        $region16: #{tpu_custom_call.1} parent=11 // pred_fallthru
          _
        // Predicated region
        $region17: #{tpu_custom_call.1} parent=11 // pred_check
          %p214 = pneg %p86
        $region18: #{tpu_custom_call.1} parent=11 // pred_check_branch
          %216 = sbr.rel (%p214) target = $region20
        $region19: #{tpu_custom_call.1} parent=11 // pred_region
          _
        $region20: #{tpu_custom_call.1} parent=11 // pred_fallthru
          _
        // Predicated region
        $region21: #{tpu_custom_call.1} parent=11 // pred_check
          %p217 = pneg %p107
        $region22: #{tpu_custom_call.1} parent=11 // pred_check_branch
          %219 = sbr.rel (%p217) target = $region24
        $region23: #{tpu_custom_call.1} parent=11 // pred_region
          _
        $region24: #{tpu_custom_call.1} parent=11 // pred_fallthru
          _
        // Predicated region
        $region25: #{tpu_custom_call.1} parent=11 // pred_check
          %p220 = pneg %p128
        $region26: #{tpu_custom_call.1} parent=11 // pred_check_branch
          %222 = sbr.rel (%p220) target = $region28
        $region27: #{tpu_custom_call.1} parent=11 // pred_region
          _
        $region28: #{tpu_custom_call.1} parent=11 // pred_fallthru
          _
        // Predicated region
        $region29: #{tpu_custom_call.1} parent=11 // pred_check
          %p223 = pneg %p149
        $region30: #{tpu_custom_call.1} parent=11 // pred_check_branch
          %225 = sbr.rel (%p223) target = $region32
        $region31: #{tpu_custom_call.1} parent=11 // pred_region
          _
        $region32: #{tpu_custom_call.1} parent=11 // pred_fallthru
          _
        // Predicated region
        $region33: #{tpu_custom_call.1} parent=11 // pred_check
          %p226 = pneg %p170
        $region34: #{tpu_custom_call.1} parent=11 // pred_check_branch
          %228 = sbr.rel (%p226) target = $region36
        $region35: #{tpu_custom_call.1} parent=11 // pred_region
          _
        $region36: #{tpu_custom_call.1} parent=11 // pred_fallthru
          _
      $region12: #{tpu_custom_call.1} parent=5 // pred_fallthru
        _
      %p229 = scmp.lt.s32.totalorder %s18, 2
      // Predicated region
      $region37: #{tpu_custom_call.1} parent=5 // pred_check
        %p230 = pneg %p229
      $region38: #{tpu_custom_call.1} parent=5 // pred_check_branch
        %232 = sbr.rel (%p230) target = $region40
      $region39: #{tpu_custom_call.1} parent=5 // pred_region
        // Predicated region
        $region41: #{tpu_custom_call.1} parent=39 // pred_check
          %p233 = pneg %p38
        $region42: #{tpu_custom_call.1} parent=39 // pred_check_branch
          %235 = sbr.rel (%p233) target = $region44
        $region43: #{tpu_custom_call.1} parent=39 // pred_region
          %s236 = smul.u32 32, %s18
          %p237 = scmp.lt.s32.totalorder %s236, 63
          %s238 = scalar_select %p237, %s236, 63
          %s239 = smul.addr %s238, 8
          %s240 = scalar_lea.vmem %s0, %s239
          %s241 = smul.u32 32, %s18
        $region44: #{tpu_custom_call.1} parent=39 // pred_fallthru
          _
      $region40: #{tpu_custom_call.1} parent=5 // pred_fallthru
        _
      %p242 = scmp.le.s32.totalorder 1, %s18
      %p243 = scmp.lt.s32.totalorder %s18, 3
      %p244 = pnand %p242, %p243
      %p245 = pneg %p244
      // Predicated region
      $region45: #{tpu_custom_call.1} parent=5 // pred_check
        _
      $region46: #{tpu_custom_call.1} parent=5 // pred_check_branch
        %247 = sbr.rel (%p244) target = $region48
      $region47: #{tpu_custom_call.1} parent=5 // pred_region
        %s248 = ssub.s32 %s18, 1
        %s249 = smul.u32 32, %s23
        %p250 = scmp.lt.s32.totalorder %s249, 63
        %s251 = scalar_select %p250, %s249, 63
        %s252 = smul.addr %s251, 8
        %s253 = scalar_lea.vmem %s0, %s252
        %p254 = pneg %p44
        %p255 = pneg %p41
        %p256 = pneg %p65
        %p257 = pneg %p62
        %p258 = pneg %p86
        %p259 = pneg %p83
        %p260 = pneg %p107
        %p261 = pneg %p104
        %p262 = pneg %p128
        %p263 = pneg %p125
        %p264 = pneg %p149
        %p265 = pneg %p146
        %p266 = pneg %p170
        %p267 = pneg %p167
        %p268 = pneg %p196
        %p269 = pneg %p193
        %s270 = sand.u32 %s183, 1
        %s271 = scalar_lea.sflag [#allocation4], %s270
        %s272 = sand.u32 %s183, 1
        %s273 = smul.addr %s272, 2
        %s274 = scalar_lea.vmem [#allocation3], %s273
        %s275 = smul.u32 32, %s23
        %p276 = scmp.lt.s32.totalorder %s275, 63
        %s277 = scalar_select %p276, %s275, 63
        %s278 = smul.addr %s277, 8
        %s279 = scalar_lea.vmem %s0, %s278
        %s280 = smul.u32 32, %s23
        %s281 = smul.u32 2, %s23
        %v282 = vld [vmem:[%s279] sm:$0xff]
        %v283 = vld [vmem:[%s279 + $0x8] sm:$0xff]
        %v284 = vld [vmem:[%s279 + $0x10] sm:$0xff]
        %v285 = vld [vmem:[%s279 + $0x18] sm:$0xff]
        %v286 = vld [vmem:[%s279 + $0x20] sm:$0xff]
        %v287 = vld [vmem:[%s279 + $0x28] sm:$0xff]
        %v288 = vld [vmem:[%s279 + $0x30] sm:$0xff]
        %v289 = vld [vmem:[%s279 + $0x38] sm:$0xff]
        %v290 = vld [vmem:[%s279 + $0x40] sm:$0xff]
        %v291 = vld [vmem:[%s279 + $0x48] sm:$0xff]
        %v292 = vld [vmem:[%s279 + $0x50] sm:$0xff]
        %v293 = vld [vmem:[%s279 + $0x58] sm:$0xff]
        %v294 = vld [vmem:[%s279 + $0x60] sm:$0xff]
        %v295 = vld [vmem:[%s279 + $0x68] sm:$0xff]
        %v296 = vld [vmem:[%s279 + $0x70] sm:$0xff]
        %v297 = vld [vmem:[%s279 + $0x78] sm:$0xff]
        %v298 = vld [vmem:[%s279 + $0x80] sm:$0xff]
        %v299 = vld [vmem:[%s279 + $0x88] sm:$0xff]
        %v300 = vld [vmem:[%s279 + $0x90] sm:$0xff]
        %v301 = vld [vmem:[%s279 + $0x98] sm:$0xff]
        %v302 = vld [vmem:[%s279 + $0xa0] sm:$0xff]
        %v303 = vld [vmem:[%s279 + $0xa8] sm:$0xff]
        %v304 = vld [vmem:[%s279 + $0xb0] sm:$0xff]
        %v305 = vld [vmem:[%s279 + $0xb8] sm:$0xff]
        %v306 = vld [vmem:[%s279 + $0xc0] sm:$0xff]
        %v307 = vld [vmem:[%s279 + $0xc8] sm:$0xff]
        %v308 = vld [vmem:[%s279 + $0xd0] sm:$0xff]
        %v309 = vld [vmem:[%s279 + $0xd8] sm:$0xff]
        %v310 = vld [vmem:[%s279 + $0xe0] sm:$0xff]
        %v311 = vld [vmem:[%s279 + $0xe8] sm:$0xff]
        %v312 = vld [vmem:[%s279 + $0xf0] sm:$0xff]
        %v313 = vld [vmem:[%s279 + $0xf8] sm:$0xff]
        %v314 = vld [vmem:[%s1] sm:$0xff]
        %v315 = vld [vmem:[%s1 + $0x8] sm:$0xff]
        %v316 = vld [vmem:[%s1 + $0x10] sm:$0xff]
        %v317 = vld [vmem:[%s1 + $0x18] sm:$0xff]
        %v318 = vld [vmem:[%s2] sm:$0x1]
        %v320 = vlaneseq
        %v321 = vshrl.u32 %v320, 7
        %v322 = vsub.s32 0, %v321
        %v323 = vrot.slane %v318, %v322
        %vm325 = vcmask 261120
        %v327 = vsel %vm325, %v282, 0
        %v330 = vsel %vm325, %v283, 0
        %v333 = vsel %vm325, %v284, 0
        %v336 = vsel %vm325, %v285, 0
        %v339 = vsel %vm325, %v286, 0
        %v342 = vsel %vm325, %v287, 0
        %v345 = vsel %vm325, %v288, 0
        %v348 = vsel %vm325, %v289, 0
        %v351 = vsel %vm325, %v290, 0
        %v354 = vsel %vm325, %v291, 0
        %v357 = vsel %vm325, %v292, 0
        %v360 = vsel %vm325, %v293, 0
        %v363 = vsel %vm325, %v294, 0
        %v366 = vsel %vm325, %v295, 0
        %v369 = vsel %vm325, %v296, 0
        %v372 = vsel %vm325, %v297, 0
        %v375 = vsel %vm325, %v298, 0
        %v378 = vsel %vm325, %v299, 0
        %v381 = vsel %vm325, %v300, 0
        %v384 = vsel %vm325, %v301, 0
        %v387 = vsel %vm325, %v302, 0
        %v390 = vsel %vm325, %v303, 0
        %v393 = vsel %vm325, %v304, 0
        %v396 = vsel %vm325, %v305, 0
        %v399 = vsel %vm325, %v306, 0
        %v402 = vsel %vm325, %v307, 0
        %v405 = vsel %vm325, %v308, 0
        %v408 = vsel %vm325, %v309, 0
        %v411 = vsel %vm325, %v310, 0
        %v414 = vsel %vm325, %v311, 0
        %v417 = vsel %vm325, %v312, 0
        %v420 = vsel %vm325, %v313, 0
        %422 = vmatprep.subr.mxu0 0.0
        %423 = vmatpush1.msra.mxu0 0.0
        %424 = vmatprep.subr.mxu0 0.0
        %425 = vmatpush1.msra.mxu0 0.0
        %426 = vmatprep.subr.mxu0 0.0
        %427 = vmatpush1.msra.mxu0 0.0
        %428 = vmatprep.subr.mxu0 0.0
        %429 = vmatpush1.msra.mxu0 0.0
        %430 = vmatprep.subr.mxu0 0.0
        %431 = vmatpush1.msra.mxu0 0.0
        %432 = vmatprep.subr.mxu0 0.0
        %433 = vmatpush1.msra.mxu0 0.0
        %434 = vmatprep.subr.mxu0 0.0
        %435 = vmatpush1.msra.mxu0 0.0
        %436 = vmatprep.subr.mxu0 0.0
        %437 = vmatpush1.msra.mxu0 0.0
        %438 = vmatprep.subr.mxu0 0.0
        %439 = vmatpush1.msra.mxu0 0.0
        %440 = vmatprep.subr.mxu0 0.0
        %441 = vmatpush1.msra.mxu0 0.0
        %442 = vmatprep.subr.mxu0 0.0
        %443 = vmatpush1.msra.mxu0 0.0
        %444 = vmatprep.subr.mxu0 0.0
        %445 = vmatpush1.msra.mxu0 0.0
        %446 = vmatprep.subr.mxu0 0.0
        %447 = vmatpush1.msra.mxu0 %v317
        %448 = vmatprep.subr.mxu0 0.0
        %449 = vmatpush1.msra.mxu0 %v316
        %450 = vmatprep.subr.mxu0 0.0
        %451 = vmatpush1.msra.mxu0 %v315
        %452 = vmatprep.subr.mxu0 0.0
        %453 = vmatpush1.msra.mxu0 %v314
        %454 = vmatprep.subr.mxu0 0.0
        %455 = vmatpush2.msra.mxu0 0.0
        %456 = vmatprep.subr.mxu0 0.0
        %457 = vmatpush2.msra.mxu0 0.0
        %458 = vmatprep.subr.mxu0 0.0
        %459 = vmatpush2.msra.mxu0 0.0
        %460 = vmatprep.subr.mxu0 0.0
        %461 = vmatpush2.msra.mxu0 0.0
        %462 = vmatprep.subr.mxu0 0.0
        %463 = vmatpush2.msra.mxu0 0.0
        %464 = vmatprep.subr.mxu0 0.0
        %465 = vmatpush2.msra.mxu0 0.0
        %466 = vmatprep.subr.mxu0 0.0
        %467 = vmatpush2.msra.mxu0 0.0
        %468 = vmatprep.subr.mxu0 0.0
        %469 = vmatpush2.msra.mxu0 0.0
        %470 = vmatprep.subr.mxu0 0.0
        %471 = vmatpush2.msra.mxu0 0.0
        %472 = vmatprep.subr.mxu0 0.0
        %473 = vmatpush2.msra.mxu0 0.0
        %474 = vmatprep.subr.mxu0 0.0
        %475 = vmatpush2.msra.mxu0 0.0
        %476 = vmatprep.subr.mxu0 0.0
        %477 = vmatpush2.msra.mxu0 0.0
        %478 = vmatprep.subr.mxu0 0.0
        %479 = vmatpush2.msra.mxu0 0.0
        %480 = vmatprep.subr.mxu0 0.0
        %481 = vmatpush2.msra.mxu0 0.0
        %482 = vmatprep.subr.mxu0 0.0
        %483 = vmatpush2.msra.mxu0 0.0
        %484 = vmatprep.subr.mxu0 0.0
        %485 = vmatpush2.msra.mxu0 0.0
        %486 = vmatprep.mubr.f32.mxu0 0.0
        %487 = vmatmul.mubr.f32.gmra.mxu0 %v327
        %v488 = vpop.f32.mrf.mxu0
        %v489 = vadd.f32 %v323, %v488
        %v490 = vpop.f32.mrf.mxu0
        %491 = vmatprep.mubr.f32.mxu0 0.0
        %492 = vmatmul.mubr.f32.gmra.mxu0 %v330
        %v493 = vpop.f32.mrf.mxu0
        %v494 = vadd.f32 %v323, %v493
        %v495 = vpop.f32.mrf.mxu0
        %496 = vmatprep.mubr.f32.mxu0 0.0
        %497 = vmatmul.mubr.f32.gmra.mxu0 %v333
        %v498 = vpop.f32.mrf.mxu0
        %v499 = vadd.f32 %v323, %v498
        %v500 = vpop.f32.mrf.mxu0
        %501 = vmatprep.mubr.f32.mxu0 0.0
        %502 = vmatmul.mubr.f32.gmra.mxu0 %v336
        %v503 = vpop.f32.mrf.mxu0
        %v504 = vadd.f32 %v323, %v503
        %v505 = vpop.f32.mrf.mxu0
        %506 = vmatprep.mubr.f32.mxu0 0.0
        %507 = vmatmul.mubr.f32.gmra.mxu0 %v339
        %v508 = vpop.f32.mrf.mxu0
        %v509 = vadd.f32 %v323, %v508
        %v510 = vpop.f32.mrf.mxu0
        %511 = vmatprep.mubr.f32.mxu0 0.0
        %512 = vmatmul.mubr.f32.gmra.mxu0 %v342
        %v513 = vpop.f32.mrf.mxu0
        %v514 = vadd.f32 %v323, %v513
        %v515 = vpop.f32.mrf.mxu0
        %516 = vmatprep.mubr.f32.mxu0 0.0
        %517 = vmatmul.mubr.f32.gmra.mxu0 %v345
        %v518 = vpop.f32.mrf.mxu0
        %v519 = vadd.f32 %v323, %v518
        %v520 = vpop.f32.mrf.mxu0
        %521 = vmatprep.mubr.f32.mxu0 0.0
        %522 = vmatmul.mubr.f32.gmra.mxu0 %v348
        %v523 = vpop.f32.mrf.mxu0
        %v524 = vadd.f32 %v323, %v523
        %v525 = vpop.f32.mrf.mxu0
        %526 = vmatprep.mubr.f32.mxu0 0.0
        %527 = vmatmul.mubr.f32.gmra.mxu0 %v351
        %v528 = vpop.f32.mrf.mxu0
        %v529 = vadd.f32 %v323, %v528
        %v530 = vpop.f32.mrf.mxu0
        %531 = vmatprep.mubr.f32.mxu0 0.0
        %532 = vmatmul.mubr.f32.gmra.mxu0 %v354
        %v533 = vpop.f32.mrf.mxu0
        %v534 = vadd.f32 %v323, %v533
        %v535 = vpop.f32.mrf.mxu0
        %536 = vmatprep.mubr.f32.mxu0 0.0
        %537 = vmatmul.mubr.f32.gmra.mxu0 %v357
        %v538 = vpop.f32.mrf.mxu0
        %v539 = vadd.f32 %v323, %v538
        %v540 = vpop.f32.mrf.mxu0
        %541 = vmatprep.mubr.f32.mxu0 0.0
        %542 = vmatmul.mubr.f32.gmra.mxu0 %v360
        %v543 = vpop.f32.mrf.mxu0
        %v544 = vadd.f32 %v323, %v543
        %v545 = vpop.f32.mrf.mxu0
        %546 = vmatprep.mubr.f32.mxu0 0.0
        %547 = vmatmul.mubr.f32.gmra.mxu0 %v363
        %v548 = vpop.f32.mrf.mxu0
        %v549 = vadd.f32 %v323, %v548
        %v550 = vpop.f32.mrf.mxu0
        %551 = vmatprep.mubr.f32.mxu0 0.0
        %552 = vmatmul.mubr.f32.gmra.mxu0 %v366
        %v553 = vpop.f32.mrf.mxu0
        %v554 = vadd.f32 %v323, %v553
        %v555 = vpop.f32.mrf.mxu0
        %556 = vmatprep.mubr.f32.mxu0 0.0
        %557 = vmatmul.mubr.f32.gmra.mxu0 %v369
        %v558 = vpop.f32.mrf.mxu0
        %v559 = vadd.f32 %v323, %v558
        %v560 = vpop.f32.mrf.mxu0
        %561 = vmatprep.mubr.f32.mxu0 0.0
        %562 = vmatmul.mubr.f32.gmra.mxu0 %v372
        %v563 = vpop.f32.mrf.mxu0
        %v564 = vadd.f32 %v323, %v563
        %v565 = vpop.f32.mrf.mxu0
        %566 = vmatprep.mubr.f32.mxu0 0.0
        %567 = vmatmul.mubr.f32.gmra.mxu0 %v375
        %v568 = vpop.f32.mrf.mxu0
        %v569 = vadd.f32 %v323, %v568
        %v570 = vpop.f32.mrf.mxu0
        %571 = vmatprep.mubr.f32.mxu0 0.0
        %572 = vmatmul.mubr.f32.gmra.mxu0 %v378
        %v573 = vpop.f32.mrf.mxu0
        %v574 = vadd.f32 %v323, %v573
        %v575 = vpop.f32.mrf.mxu0
        %576 = vmatprep.mubr.f32.mxu0 0.0
        %577 = vmatmul.mubr.f32.gmra.mxu0 %v381
        %v578 = vpop.f32.mrf.mxu0
        %v579 = vadd.f32 %v323, %v578
        %v580 = vpop.f32.mrf.mxu0
        %581 = vmatprep.mubr.f32.mxu0 0.0
        %582 = vmatmul.mubr.f32.gmra.mxu0 %v384
        %v583 = vpop.f32.mrf.mxu0
        %v584 = vadd.f32 %v323, %v583
        %v585 = vpop.f32.mrf.mxu0
        %586 = vmatprep.mubr.f32.mxu0 0.0
        %587 = vmatmul.mubr.f32.gmra.mxu0 %v387
        %v588 = vpop.f32.mrf.mxu0
        %v589 = vadd.f32 %v323, %v588
        %v590 = vpop.f32.mrf.mxu0
        %591 = vmatprep.mubr.f32.mxu0 0.0
        %592 = vmatmul.mubr.f32.gmra.mxu0 %v390
        %v593 = vpop.f32.mrf.mxu0
        %v594 = vadd.f32 %v323, %v593
        %v595 = vpop.f32.mrf.mxu0
        %596 = vmatprep.mubr.f32.mxu0 0.0
        %597 = vmatmul.mubr.f32.gmra.mxu0 %v393
        %v598 = vpop.f32.mrf.mxu0
        %v599 = vadd.f32 %v323, %v598
        %v600 = vpop.f32.mrf.mxu0
        %601 = vmatprep.mubr.f32.mxu0 0.0
        %602 = vmatmul.mubr.f32.gmra.mxu0 %v396
        %v603 = vpop.f32.mrf.mxu0
        %v604 = vadd.f32 %v323, %v603
        %v605 = vpop.f32.mrf.mxu0
        %606 = vmatprep.mubr.f32.mxu0 0.0
        %607 = vmatmul.mubr.f32.gmra.mxu0 %v399
        %v608 = vpop.f32.mrf.mxu0
        %v609 = vadd.f32 %v323, %v608
        %v610 = vpop.f32.mrf.mxu0
        %611 = vmatprep.mubr.f32.mxu0 0.0
        %612 = vmatmul.mubr.f32.gmra.mxu0 %v402
        %v613 = vpop.f32.mrf.mxu0
        %v614 = vadd.f32 %v323, %v613
        %v615 = vpop.f32.mrf.mxu0
        %616 = vmatprep.mubr.f32.mxu0 0.0
        %617 = vmatmul.mubr.f32.gmra.mxu0 %v405
        %v618 = vpop.f32.mrf.mxu0
        %v619 = vadd.f32 %v323, %v618
        %v620 = vpop.f32.mrf.mxu0
        %621 = vmatprep.mubr.f32.mxu0 0.0
        %622 = vmatmul.mubr.f32.gmra.mxu0 %v408
        %v623 = vpop.f32.mrf.mxu0
        %v624 = vadd.f32 %v323, %v623
        %v625 = vpop.f32.mrf.mxu0
        %626 = vmatprep.mubr.f32.mxu0 0.0
        %627 = vmatmul.mubr.f32.gmra.mxu0 %v411
        %v628 = vpop.f32.mrf.mxu0
        %v629 = vadd.f32 %v323, %v628
        %v630 = vpop.f32.mrf.mxu0
        %631 = vmatprep.mubr.f32.mxu0 0.0
        %632 = vmatmul.mubr.f32.gmra.mxu0 %v414
        %v633 = vpop.f32.mrf.mxu0
        %v634 = vadd.f32 %v323, %v633
        %v635 = vpop.f32.mrf.mxu0
        %636 = vmatprep.mubr.f32.mxu0 0.0
        %637 = vmatmul.mubr.f32.gmra.mxu0 %v417
        %v638 = vpop.f32.mrf.mxu0
        %v639 = vadd.f32 %v323, %v638
        %v640 = vpop.f32.mrf.mxu0
        %641 = vmatprep.mubr.f32.mxu0 0.0
        %642 = vmatmul.mubr.f32.gmra.mxu0 %v420
        %v643 = vpop.f32.mrf.mxu0
        %v644 = vadd.f32 %v323, %v643
        %v645 = vpop.f32.mrf.mxu0
        %646 = vdwg.mxu0
        %v647 = vmax.f32 %v489, 0.0
        %v648 = vmax.f32 %v494, 0.0
        %v649 = vmax.f32 %v499, 0.0
        %v650 = vmax.f32 %v504, 0.0
        %v651 = vmax.f32 %v509, 0.0
        %v652 = vmax.f32 %v514, 0.0
        %v653 = vmax.f32 %v519, 0.0
        %v654 = vmax.f32 %v524, 0.0
        %v655 = vmax.f32 %v529, 0.0
        %v656 = vmax.f32 %v534, 0.0
        %v657 = vmax.f32 %v539, 0.0
        %v658 = vmax.f32 %v544, 0.0
        %v659 = vmax.f32 %v549, 0.0
        %v660 = vmax.f32 %v554, 0.0
        %v661 = vmax.f32 %v559, 0.0
        %v662 = vmax.f32 %v564, 0.0
        %v663 = vmax.f32 %v569, 0.0
        %v664 = vmax.f32 %v574, 0.0
        %v665 = vmax.f32 %v579, 0.0
        %v666 = vmax.f32 %v584, 0.0
        %v667 = vmax.f32 %v589, 0.0
        %v668 = vmax.f32 %v594, 0.0
        %v669 = vmax.f32 %v599, 0.0
        %v670 = vmax.f32 %v604, 0.0
        %v671 = vmax.f32 %v609, 0.0
        %v672 = vmax.f32 %v614, 0.0
        %v673 = vmax.f32 %v619, 0.0
        %v674 = vmax.f32 %v624, 0.0
        %v675 = vmax.f32 %v629, 0.0
        %v676 = vmax.f32 %v634, 0.0
        %v677 = vmax.f32 %v639, 0.0
        %v678 = vmax.f32 %v644, 0.0
        %v679 = vld [vmem:[%s3] sm:$0xff]
        %v680 = vld [vmem:[%s3 + $0x8] sm:$0xff]
        %v681 = vld [vmem:[%s3 + $0x10] sm:$0xff]
        %v682 = vld [vmem:[%s3 + $0x18] sm:$0xff]
        %v683 = vld [vmem:[%s3 + $0x20] sm:$0xff]
        %v684 = vld [vmem:[%s3 + $0x28] sm:$0xff]
        %v685 = vld [vmem:[%s3 + $0x30] sm:$0xff]
        %v686 = vld [vmem:[%s3 + $0x38] sm:$0xff]
        %v687 = vld [vmem:[%s4] sm:$0x1]
        %v689 = vlaneseq
        %v690 = vshrl.u32 %v689, 7
        %v691 = vsub.s32 0, %v690
        %v692 = vrot.slane %v687, %v691
        %vm694 = vcmask 523264
        %v696 = vsel %vm694, %v647, 0
        %v699 = vsel %vm694, %v648, 0
        %v702 = vsel %vm694, %v649, 0
        %v705 = vsel %vm694, %v650, 0
        %v708 = vsel %vm694, %v651, 0
        %v711 = vsel %vm694, %v652, 0
        %v714 = vsel %vm694, %v653, 0
        %v717 = vsel %vm694, %v654, 0
        %v720 = vsel %vm694, %v655, 0
        %v723 = vsel %vm694, %v656, 0
        %v726 = vsel %vm694, %v657, 0
        %v729 = vsel %vm694, %v658, 0
        %v732 = vsel %vm694, %v659, 0
        %v735 = vsel %vm694, %v660, 0
        %v738 = vsel %vm694, %v661, 0
        %v741 = vsel %vm694, %v662, 0
        %v744 = vsel %vm694, %v663, 0
        %v747 = vsel %vm694, %v664, 0
        %v750 = vsel %vm694, %v665, 0
        %v753 = vsel %vm694, %v666, 0
        %v756 = vsel %vm694, %v667, 0
        %v759 = vsel %vm694, %v668, 0
        %v762 = vsel %vm694, %v669, 0
        %v765 = vsel %vm694, %v670, 0
        %v768 = vsel %vm694, %v671, 0
        %v771 = vsel %vm694, %v672, 0
        %v774 = vsel %vm694, %v673, 0
        %v777 = vsel %vm694, %v674, 0
        %v780 = vsel %vm694, %v675, 0
        %v783 = vsel %vm694, %v676, 0
        %v786 = vsel %vm694, %v677, 0
        %v789 = vsel %vm694, %v678, 0
        %791 = vmatprep.subr.mxu0 0.0
        %792 = vmatpush1.msra.mxu0 0.0
        %793 = vmatprep.subr.mxu0 0.0
        %794 = vmatpush1.msra.mxu0 0.0
        %795 = vmatprep.subr.mxu0 0.0
        %796 = vmatpush1.msra.mxu0 0.0
        %797 = vmatprep.subr.mxu0 0.0
        %798 = vmatpush1.msra.mxu0 0.0
        %799 = vmatprep.subr.mxu0 0.0
        %800 = vmatpush1.msra.mxu0 0.0
        %801 = vmatprep.subr.mxu0 0.0
        %802 = vmatpush1.msra.mxu0 0.0
        %803 = vmatprep.subr.mxu0 0.0
        %804 = vmatpush1.msra.mxu0 0.0
        %805 = vmatprep.subr.mxu0 0.0
        %806 = vmatpush1.msra.mxu0 0.0
        %807 = vmatprep.subr.mxu0 0.0
        %808 = vmatpush1.msra.mxu0 %v686
        %809 = vmatprep.subr.mxu0 0.0
        %810 = vmatpush1.msra.mxu0 %v685
        %811 = vmatprep.subr.mxu0 0.0
        %812 = vmatpush1.msra.mxu0 %v684
        %813 = vmatprep.subr.mxu0 0.0
        %814 = vmatpush1.msra.mxu0 %v683
        %815 = vmatprep.subr.mxu0 0.0
        %816 = vmatpush1.msra.mxu0 %v682
        %817 = vmatprep.subr.mxu0 0.0
        %818 = vmatpush1.msra.mxu0 %v681
        %819 = vmatprep.subr.mxu0 0.0
        %820 = vmatpush1.msra.mxu0 %v680
        %821 = vmatprep.subr.mxu0 0.0
        %822 = vmatpush1.msra.mxu0 %v679
        %823 = vmatprep.subr.mxu0 0.0
        %824 = vmatpush2.msra.mxu0 0.0
        %825 = vmatprep.subr.mxu0 0.0
        %826 = vmatpush2.msra.mxu0 0.0
        %827 = vmatprep.subr.mxu0 0.0
        %828 = vmatpush2.msra.mxu0 0.0
        %829 = vmatprep.subr.mxu0 0.0
        %830 = vmatpush2.msra.mxu0 0.0
        %831 = vmatprep.subr.mxu0 0.0
        %832 = vmatpush2.msra.mxu0 0.0
        %833 = vmatprep.subr.mxu0 0.0
        %834 = vmatpush2.msra.mxu0 0.0
        %835 = vmatprep.subr.mxu0 0.0
        %836 = vmatpush2.msra.mxu0 0.0
        %837 = vmatprep.subr.mxu0 0.0
        %838 = vmatpush2.msra.mxu0 0.0
        %839 = vmatprep.subr.mxu0 0.0
        %840 = vmatpush2.msra.mxu0 0.0
        %841 = vmatprep.subr.mxu0 0.0
        %842 = vmatpush2.msra.mxu0 0.0
        %843 = vmatprep.subr.mxu0 0.0
        %844 = vmatpush2.msra.mxu0 0.0
        %845 = vmatprep.subr.mxu0 0.0
        %846 = vmatpush2.msra.mxu0 0.0
        %847 = vmatprep.subr.mxu0 0.0
        %848 = vmatpush2.msra.mxu0 0.0
        %849 = vmatprep.subr.mxu0 0.0
        %850 = vmatpush2.msra.mxu0 0.0
        %851 = vmatprep.subr.mxu0 0.0
        %852 = vmatpush2.msra.mxu0 0.0
        %853 = vmatprep.subr.mxu0 0.0
        %854 = vmatpush2.msra.mxu0 0.0
        %855 = vmatprep.mubr.f32.mxu0 0.0
        %856 = vmatmul.mubr.f32.gmra.mxu0 %v696
        %v857 = vpop.f32.mrf.mxu0
        %v858 = vadd.f32 %v692, %v857
        %v859 = vpop.f32.mrf.mxu0
        %860 = vmatprep.mubr.f32.mxu0 0.0
        %861 = vmatmul.mubr.f32.gmra.mxu0 %v699
        %v862 = vpop.f32.mrf.mxu0
        %v863 = vadd.f32 %v692, %v862
        %v864 = vpop.f32.mrf.mxu0
        %865 = vmatprep.mubr.f32.mxu0 0.0
        %866 = vmatmul.mubr.f32.gmra.mxu0 %v702
        %v867 = vpop.f32.mrf.mxu0
        %v868 = vadd.f32 %v692, %v867
        %v869 = vpop.f32.mrf.mxu0
        %870 = vmatprep.mubr.f32.mxu0 0.0
        %871 = vmatmul.mubr.f32.gmra.mxu0 %v705
        %v872 = vpop.f32.mrf.mxu0
        %v873 = vadd.f32 %v692, %v872
        %v874 = vpop.f32.mrf.mxu0
        %875 = vmatprep.mubr.f32.mxu0 0.0
        %876 = vmatmul.mubr.f32.gmra.mxu0 %v708
        %v877 = vpop.f32.mrf.mxu0
        %v878 = vadd.f32 %v692, %v877
        %v879 = vpop.f32.mrf.mxu0
        %880 = vmatprep.mubr.f32.mxu0 0.0
        %881 = vmatmul.mubr.f32.gmra.mxu0 %v711
        %v882 = vpop.f32.mrf.mxu0
        %v883 = vadd.f32 %v692, %v882
        %v884 = vpop.f32.mrf.mxu0
        %885 = vmatprep.mubr.f32.mxu0 0.0
        %886 = vmatmul.mubr.f32.gmra.mxu0 %v714
        %v887 = vpop.f32.mrf.mxu0
        %v888 = vadd.f32 %v692, %v887
        %v889 = vpop.f32.mrf.mxu0
        %890 = vmatprep.mubr.f32.mxu0 0.0
        %891 = vmatmul.mubr.f32.gmra.mxu0 %v717
        %v892 = vpop.f32.mrf.mxu0
        %v893 = vadd.f32 %v692, %v892
        %v894 = vpop.f32.mrf.mxu0
        %895 = vmatprep.mubr.f32.mxu0 0.0
        %896 = vmatmul.mubr.f32.gmra.mxu0 %v720
        %v897 = vpop.f32.mrf.mxu0
        %v898 = vadd.f32 %v692, %v897
        %v899 = vpop.f32.mrf.mxu0
        %900 = vmatprep.mubr.f32.mxu0 0.0
        %901 = vmatmul.mubr.f32.gmra.mxu0 %v723
        %v902 = vpop.f32.mrf.mxu0
        %v903 = vadd.f32 %v692, %v902
        %v904 = vpop.f32.mrf.mxu0
        %905 = vmatprep.mubr.f32.mxu0 0.0
        %906 = vmatmul.mubr.f32.gmra.mxu0 %v726
        %v907 = vpop.f32.mrf.mxu0
        %v908 = vadd.f32 %v692, %v907
        %v909 = vpop.f32.mrf.mxu0
        %910 = vmatprep.mubr.f32.mxu0 0.0
        %911 = vmatmul.mubr.f32.gmra.mxu0 %v729
        %v912 = vpop.f32.mrf.mxu0
        %v913 = vadd.f32 %v692, %v912
        %v914 = vpop.f32.mrf.mxu0
        %915 = vmatprep.mubr.f32.mxu0 0.0
        %916 = vmatmul.mubr.f32.gmra.mxu0 %v732
        %v917 = vpop.f32.mrf.mxu0
        %v918 = vadd.f32 %v692, %v917
        %v919 = vpop.f32.mrf.mxu0
        %920 = vmatprep.mubr.f32.mxu0 0.0
        %921 = vmatmul.mubr.f32.gmra.mxu0 %v735
        %v922 = vpop.f32.mrf.mxu0
        %v923 = vadd.f32 %v692, %v922
        %v924 = vpop.f32.mrf.mxu0
        %925 = vmatprep.mubr.f32.mxu0 0.0
        %926 = vmatmul.mubr.f32.gmra.mxu0 %v738
        %v927 = vpop.f32.mrf.mxu0
        %v928 = vadd.f32 %v692, %v927
        %v929 = vpop.f32.mrf.mxu0
        %930 = vmatprep.mubr.f32.mxu0 0.0
        %931 = vmatmul.mubr.f32.gmra.mxu0 %v741
        %v932 = vpop.f32.mrf.mxu0
        %v933 = vadd.f32 %v692, %v932
        %v934 = vpop.f32.mrf.mxu0
        %935 = vmatprep.mubr.f32.mxu0 0.0
        %936 = vmatmul.mubr.f32.gmra.mxu0 %v744
        %v937 = vpop.f32.mrf.mxu0
        %v938 = vadd.f32 %v692, %v937
        %v939 = vpop.f32.mrf.mxu0
        %940 = vmatprep.mubr.f32.mxu0 0.0
        %941 = vmatmul.mubr.f32.gmra.mxu0 %v747
        %v942 = vpop.f32.mrf.mxu0
        %v943 = vadd.f32 %v692, %v942
        %v944 = vpop.f32.mrf.mxu0
        %945 = vmatprep.mubr.f32.mxu0 0.0
        %946 = vmatmul.mubr.f32.gmra.mxu0 %v750
        %v947 = vpop.f32.mrf.mxu0
        %v948 = vadd.f32 %v692, %v947
        %v949 = vpop.f32.mrf.mxu0
        %950 = vmatprep.mubr.f32.mxu0 0.0
        %951 = vmatmul.mubr.f32.gmra.mxu0 %v753
        %v952 = vpop.f32.mrf.mxu0
        %v953 = vadd.f32 %v692, %v952
        %v954 = vpop.f32.mrf.mxu0
        %955 = vmatprep.mubr.f32.mxu0 0.0
        %956 = vmatmul.mubr.f32.gmra.mxu0 %v756
        %v957 = vpop.f32.mrf.mxu0
        %v958 = vadd.f32 %v692, %v957
        %v959 = vpop.f32.mrf.mxu0
        %960 = vmatprep.mubr.f32.mxu0 0.0
        %961 = vmatmul.mubr.f32.gmra.mxu0 %v759
        %v962 = vpop.f32.mrf.mxu0
        %v963 = vadd.f32 %v692, %v962
        %v964 = vpop.f32.mrf.mxu0
        %965 = vmatprep.mubr.f32.mxu0 0.0
        %966 = vmatmul.mubr.f32.gmra.mxu0 %v762
        %v967 = vpop.f32.mrf.mxu0
        %v968 = vadd.f32 %v692, %v967
        %v969 = vpop.f32.mrf.mxu0
        %970 = vmatprep.mubr.f32.mxu0 0.0
        %971 = vmatmul.mubr.f32.gmra.mxu0 %v765
        %v972 = vpop.f32.mrf.mxu0
        %v973 = vadd.f32 %v692, %v972
        %v974 = vpop.f32.mrf.mxu0
        %975 = vmatprep.mubr.f32.mxu0 0.0
        %976 = vmatmul.mubr.f32.gmra.mxu0 %v768
        %v977 = vpop.f32.mrf.mxu0
        %v978 = vadd.f32 %v692, %v977
        %v979 = vpop.f32.mrf.mxu0
        %980 = vmatprep.mubr.f32.mxu0 0.0
        %981 = vmatmul.mubr.f32.gmra.mxu0 %v771
        %v982 = vpop.f32.mrf.mxu0
        %v983 = vadd.f32 %v692, %v982
        %v984 = vpop.f32.mrf.mxu0
        %985 = vmatprep.mubr.f32.mxu0 0.0
        %986 = vmatmul.mubr.f32.gmra.mxu0 %v774
        %v987 = vpop.f32.mrf.mxu0
        %v988 = vadd.f32 %v692, %v987
        %v989 = vpop.f32.mrf.mxu0
        %990 = vmatprep.mubr.f32.mxu0 0.0
        %991 = vmatmul.mubr.f32.gmra.mxu0 %v777
        %v992 = vpop.f32.mrf.mxu0
        %v993 = vadd.f32 %v692, %v992
        %v994 = vpop.f32.mrf.mxu0
        %995 = vmatprep.mubr.f32.mxu0 0.0
        %996 = vmatmul.mubr.f32.gmra.mxu0 %v780
        %v997 = vpop.f32.mrf.mxu0
        %v998 = vadd.f32 %v692, %v997
        %v999 = vpop.f32.mrf.mxu0
        %1000 = vmatprep.mubr.f32.mxu0 0.0
        %1001 = vmatmul.mubr.f32.gmra.mxu0 %v783
        %v1002 = vpop.f32.mrf.mxu0
        %v1003 = vadd.f32 %v692, %v1002
        %v1004 = vpop.f32.mrf.mxu0
        %1005 = vmatprep.mubr.f32.mxu0 0.0
        %1006 = vmatmul.mubr.f32.gmra.mxu0 %v786
        %v1007 = vpop.f32.mrf.mxu0
        %v1008 = vadd.f32 %v692, %v1007
        %v1009 = vpop.f32.mrf.mxu0
        %1010 = vmatprep.mubr.f32.mxu0 0.0
        %1011 = vmatmul.mubr.f32.gmra.mxu0 %v789
        %v1012 = vpop.f32.mrf.mxu0
        %v1013 = vadd.f32 %v692, %v1012
        %v1014 = vpop.f32.mrf.mxu0
        %1015 = vdwg.mxu0
        %v1016 = vmax.f32 %v858, 0.0
        %v1017 = vmax.f32 %v863, 0.0
        %v1018 = vmax.f32 %v868, 0.0
        %v1019 = vmax.f32 %v873, 0.0
        %v1020 = vmax.f32 %v878, 0.0
        %v1021 = vmax.f32 %v883, 0.0
        %v1022 = vmax.f32 %v888, 0.0
        %v1023 = vmax.f32 %v893, 0.0
        %v1024 = vmax.f32 %v898, 0.0
        %v1025 = vmax.f32 %v903, 0.0
        %v1026 = vmax.f32 %v908, 0.0
        %v1027 = vmax.f32 %v913, 0.0
        %v1028 = vmax.f32 %v918, 0.0
        %v1029 = vmax.f32 %v923, 0.0
        %v1030 = vmax.f32 %v928, 0.0
        %v1031 = vmax.f32 %v933, 0.0
        %v1032 = vmax.f32 %v938, 0.0
        %v1033 = vmax.f32 %v943, 0.0
        %v1034 = vmax.f32 %v948, 0.0
        %v1035 = vmax.f32 %v953, 0.0
        %v1036 = vmax.f32 %v958, 0.0
        %v1037 = vmax.f32 %v963, 0.0
        %v1038 = vmax.f32 %v968, 0.0
        %v1039 = vmax.f32 %v973, 0.0
        %v1040 = vmax.f32 %v978, 0.0
        %v1041 = vmax.f32 %v983, 0.0
        %v1042 = vmax.f32 %v988, 0.0
        %v1043 = vmax.f32 %v993, 0.0
        %v1044 = vmax.f32 %v998, 0.0
        %v1045 = vmax.f32 %v1003, 0.0
        %v1046 = vmax.f32 %v1008, 0.0
        %v1047 = vmax.f32 %v1013, 0.0
        %v1048 = vld [vmem:[%s5] sm:$0x1]
        %v1049 = vld [vmem:[#allocation2] sm:$0x1]
        %1051 = vset.pattern.permute.xlu0 0
        %1052 = vperm.xlu0 %1051, %v1049
        %v1053 = vpop.permute.xlu0 %1052
        %v1055 = vlaneseq
        %v1056 = vshrl.u32 %v1055, 7
        %v1057 = vsub.s32 0, %v1056
        %v1058 = vrot.slane %v1053, %v1057
        %v1060 = vsel %vm694, %v1048, 0
        %v1063 = vsel %vm694, %v1016, 0
        %v1066 = vsel %vm694, %v1017, 0
        %v1069 = vsel %vm694, %v1018, 0
        %v1072 = vsel %vm694, %v1019, 0
        %v1075 = vsel %vm694, %v1020, 0
        %v1078 = vsel %vm694, %v1021, 0
        %v1081 = vsel %vm694, %v1022, 0
        %v1084 = vsel %vm694, %v1023, 0
        %v1087 = vsel %vm694, %v1024, 0
        %v1090 = vsel %vm694, %v1025, 0
        %v1093 = vsel %vm694, %v1026, 0
        %v1096 = vsel %vm694, %v1027, 0
        %v1099 = vsel %vm694, %v1028, 0
        %v1102 = vsel %vm694, %v1029, 0
        %v1105 = vsel %vm694, %v1030, 0
        %v1108 = vsel %vm694, %v1031, 0
        %v1111 = vsel %vm694, %v1032, 0
        %v1114 = vsel %vm694, %v1033, 0
        %v1117 = vsel %vm694, %v1034, 0
        %v1120 = vsel %vm694, %v1035, 0
        %v1123 = vsel %vm694, %v1036, 0
        %v1126 = vsel %vm694, %v1037, 0
        %v1129 = vsel %vm694, %v1038, 0
        %v1132 = vsel %vm694, %v1039, 0
        %v1135 = vsel %vm694, %v1040, 0
        %v1138 = vsel %vm694, %v1041, 0
        %v1141 = vsel %vm694, %v1042, 0
        %v1144 = vsel %vm694, %v1043, 0
        %v1147 = vsel %vm694, %v1044, 0
        %v1150 = vsel %vm694, %v1045, 0
        %v1153 = vsel %vm694, %v1046, 0
        %v1156 = vsel %vm694, %v1047, 0
        %1158 = vmatprep.subr.mxu0 0.0
        %1159 = vmatpush1.xpose.msra.mxu0 %v1108
        %1160 = vmatprep.subr.mxu0 0.0
        %1161 = vmatpush1.xpose.msra.mxu0 %v1105
        %1162 = vmatprep.subr.mxu0 0.0
        %1163 = vmatpush1.xpose.msra.mxu0 %v1102
        %1164 = vmatprep.subr.mxu0 0.0
        %1165 = vmatpush1.xpose.msra.mxu0 %v1099
        %1166 = vmatprep.subr.mxu0 0.0
        %1167 = vmatpush1.xpose.msra.mxu0 %v1096
        %1168 = vmatprep.subr.mxu0 0.0
        %1169 = vmatpush1.xpose.msra.mxu0 %v1093
        %1170 = vmatprep.subr.mxu0 0.0
        %1171 = vmatpush1.xpose.msra.mxu0 %v1090
        %1172 = vmatprep.subr.mxu0 0.0
        %1173 = vmatpush1.xpose.msra.mxu0 %v1087
        %1174 = vmatprep.subr.mxu0 0.0
        %1175 = vmatpush1.xpose.msra.mxu0 %v1084
        %1176 = vmatprep.subr.mxu0 0.0
        %1177 = vmatpush1.xpose.msra.mxu0 %v1081
        %1178 = vmatprep.subr.mxu0 0.0
        %1179 = vmatpush1.xpose.msra.mxu0 %v1078
        %1180 = vmatprep.subr.mxu0 0.0
        %1181 = vmatpush1.xpose.msra.mxu0 %v1075
        %1182 = vmatprep.subr.mxu0 0.0
        %1183 = vmatpush1.xpose.msra.mxu0 %v1072
        %1184 = vmatprep.subr.mxu0 0.0
        %1185 = vmatpush1.xpose.msra.mxu0 %v1069
        %1186 = vmatprep.subr.mxu0 0.0
        %1187 = vmatpush1.xpose.msra.mxu0 %v1066
        %1188 = vmatprep.subr.mxu0 0.0
        %1189 = vmatpush1.xpose.msra.mxu0 %v1063
        %1190 = vmatprep.subr.mxu0 0.0
        %1191 = vmatpush2.xpose.msra.mxu0 %v1156
        %1192 = vmatprep.subr.mxu0 0.0
        %1193 = vmatpush2.xpose.msra.mxu0 %v1153
        %1194 = vmatprep.subr.mxu0 0.0
        %1195 = vmatpush2.xpose.msra.mxu0 %v1150
        %1196 = vmatprep.subr.mxu0 0.0
        %1197 = vmatpush2.xpose.msra.mxu0 %v1147
        %1198 = vmatprep.subr.mxu0 0.0
        %1199 = vmatpush2.xpose.msra.mxu0 %v1144
        %1200 = vmatprep.subr.mxu0 0.0
        %1201 = vmatpush2.xpose.msra.mxu0 %v1141
        %1202 = vmatprep.subr.mxu0 0.0
        %1203 = vmatpush2.xpose.msra.mxu0 %v1138
        %1204 = vmatprep.subr.mxu0 0.0
        %1205 = vmatpush2.xpose.msra.mxu0 %v1135
        %1206 = vmatprep.subr.mxu0 0.0
        %1207 = vmatpush2.xpose.msra.mxu0 %v1132
        %1208 = vmatprep.subr.mxu0 0.0
        %1209 = vmatpush2.xpose.msra.mxu0 %v1129
        %1210 = vmatprep.subr.mxu0 0.0
        %1211 = vmatpush2.xpose.msra.mxu0 %v1126
        %1212 = vmatprep.subr.mxu0 0.0
        %1213 = vmatpush2.xpose.msra.mxu0 %v1123
        %1214 = vmatprep.subr.mxu0 0.0
        %1215 = vmatpush2.xpose.msra.mxu0 %v1120
        %1216 = vmatprep.subr.mxu0 0.0
        %1217 = vmatpush2.xpose.msra.mxu0 %v1117
        %1218 = vmatprep.subr.mxu0 0.0
        %1219 = vmatpush2.xpose.msra.mxu0 %v1114
        %1220 = vmatprep.subr.mxu0 0.0
        %1221 = vmatpush2.xpose.msra.mxu0 %v1111
        %1222 = vmatprep.mubr.f32.mxu0 0.0
        %1223 = vmatmul.mubr.f32.gmra.mxu0 %v1060
        %v1224 = vpop.f32.mrf.mxu0
        %v1225 = vadd.f32 %v1058, %v1224
        %v1226 = vpop.f32.mrf.mxu0
        %v1227 = vadd.f32 %v1058, %v1226
        %1228 = vdwg.mxu0
        %v1231 = vcombine.low %v1225, %v1227
        %v1233 = vunpack.c.l.s4 1966171168
        %v1234 = vunpack.c.0.s8 %v1233
        %v1235 = vlaneseq
        %v1236 = vshrl.u32 %v1235, 7
        %v1237 = vsub.s32 %v1234, %v1236
        %v1238 = vrot.slane %v1231, %v1237
        %v1240 = vunpack.c.l.s4 1966171168
        %v1241 = vunpack.c.0.s8 %v1240
        %v1242 = vlaneseq
        %v1243 = vshrl.u32 %v1242, 7
        %v1244 = vsub.s32 %v1241, %v1243
        %v1245 = vrot.slane %v1238, %v1244
        %v1247 = vlaneseq
        %vm1248 = vcmp.ge.s32.totalorder %v1247, 0
        %vm1249 = vcmp.lt.s32.totalorder %v1247, 256
        %vm1250 = vmand %vm1248, %vm1249
        %1251 = vst.msk [vmem:[%s274] sm:$0x3] %vm1250, %v1245
        %s1252 = sand.u32 %s183, 1
        %s1253 = scalar_lea.sflag [#allocation4], %s1252
        %s1254 = sand.u32 %s183, 1
        %s1255 = smul.addr %s1254, 2
        %s1256 = scalar_lea.vmem [#allocation3], %s1255
        // Predicated region
        $region49: #{tpu_custom_call.1} parent=47 // pred_check
          %p1257 = pneg %p193
        $region50: #{tpu_custom_call.1} parent=47 // pred_check_branch
          %1259 = sbr.rel (%p1257) target = $region52
        $region51: #{tpu_custom_call.1} parent=47 // pred_region
          %s1260 = smul.u32 2, %s23
          %s1262 = ssub.s32 32, 32
          %1263 = vsyncadd %s1253, %s1262
          %s1264 = smul.addr %s1260, 16
          %s1265 = scalar_lea.hbm %s7, %s1264
          %s1267 = sshll.u32 %s1256, 4
          %s1268 = int_to_ptr.vmem [resolvable:$true] %s1267
          %1270 = dma.vmem_to_hbm [thread:$0]  %s1268, 32, %s1265, %s1253
        $region52: #{tpu_custom_call.1} parent=47 // pred_fallthru
          _
      $region48: #{tpu_custom_call.1} parent=5 // pred_fallthru
        _
      %p1271 = scmp.le.s32.totalorder 2, %s18
      // Predicated region
      $region53: #{tpu_custom_call.1} parent=5 // pred_check
        %p1272 = pneg %p1271
      $region54: #{tpu_custom_call.1} parent=5 // pred_check_branch
        %1274 = sbr.rel (%p1272) target = $region56
      $region55: #{tpu_custom_call.1} parent=5 // pred_region
        %s1275 = ssub.s32 %s18, 2
        // Predicated region
        $region57: #{tpu_custom_call.1} parent=55 // pred_check
          %p1276 = pneg %p199
        $region58: #{tpu_custom_call.1} parent=55 // pred_check_branch
          %1278 = sbr.rel (%p1276) target = $region60
        $region59: #{tpu_custom_call.1} parent=55 // pred_region
          %s1279 = sand.u32 %s184, 1
          %s1280 = scalar_lea.sflag [#allocation4], %s1279
          %s1281 = sand.u32 %s184, 1
          %s1282 = smul.addr %s1281, 2
          %s1283 = scalar_lea.vmem [#allocation3], %s1282
          %1284 = dma.done %s1280, 32
        $region60: #{tpu_custom_call.1} parent=55 // pred_fallthru
          _
      $region56: #{tpu_custom_call.1} parent=5 // pred_fallthru
        _
    $region6: #{tpu_custom_call.1} parent=1 // loop_footer
      %s22 = sadd.s32 1, %s18
    $region7: #{tpu_custom_call.1} parent=1 // loop_footer_branch
      %17 = sbr.rel target = $region3
    $region8: #{tpu_custom_call.1} parent=1 // loop_exit
      _
    %1285 = vsyncpa [#allocation4], 1
    %s1286 = scalar_lea.sflag [#allocation4], 1
    %1287 = vsyncpa %s1286, 1

</llo_original>
